<compile_context>
chip_gen: v5e
topology: v5e:2x2
jax: 0.10.0
libtpu: 0.0.40
codegen_flags: <defaults>
</compile_context>

<pallas_src>
import functools

import jax
import jax.numpy as jnp
from jax import lax
from jax.experimental import pallas as pl
from jax.experimental.pallas import tpu as pltpu


# ---------------------------------------------------------------------------
# Plain-JAX glue: sampling / grouping / augmentor
# TODO(synk): FPS (sequential data-dependent argmax), kNN top-k and the neighbor
#             gather have no clean Pallas TPU equivalent at these sizes; kept in
#             plain JAX.
# ---------------------------------------------------------------------------
def square_distance(src, dst):
    # src (B,S,C), dst (B,N,C) -> (B,S,N)
    dist = -2.0 * jnp.einsum("bsc,bnc->bsn", src, dst)
    dist = dist + jnp.sum(src ** 2, axis=-1)[:, :, None]
    dist = dist + jnp.sum(dst ** 2, axis=-1)[:, None, :]
    return dist


def index_points(points, idx):
    # points (B,N,C), idx (B,...) int -> (B,...,C)
    B = points.shape[0]
    batch_idx = jnp.arange(B).reshape((B,) + (1,) * (idx.ndim - 1))
    return points[batch_idx, idx]


def farthest_point_sample(xyz, npoint):
    """xyz (B,N,3) -> (B,npoint) int32.  Initial farthest index fixed to 0
    (reference uses randint; any start is semantically valid FPS)."""
    B, N, _ = xyz.shape

    def body(i, carry):
        distance, farthest, centroids = carry
        centroids = centroids.at[:, i].set(farthest)
        centroid = xyz[jnp.arange(B), farthest][:, None, :]      # (B,1,3)
        dist = jnp.sum((xyz - centroid) ** 2, axis=-1)
        distance = jnp.minimum(distance, dist)
        farthest = jnp.argmax(distance, axis=-1).astype(jnp.int32)
        return distance, farthest, centroids

    distance = jnp.full((B, N), 1e10, dtype=xyz.dtype)
    farthest = jnp.zeros((B,), jnp.int32)
    centroids = jnp.zeros((B, npoint), jnp.int32)
    _, _, centroids = lax.fori_loop(0, npoint, body,
                                    (distance, farthest, centroids))
    return centroids


def knn_indices(query, ref, k):
    """Matches the reference knn(): top-k of -||q-r||^2 (largest == nearest),
    restricted to the query (centroid) rows — identical to computing the full
    kNN graph and then indexing it with fps_idx."""
    neg_dist = -square_distance(query, ref)                      # (B,S,N)
    _, idx = lax.top_k(neg_dist, k)
    return idx


def sample_and_group(npoint, nsample, xyz, points):
    fps_idx = farthest_point_sample(xyz, npoint)                 # (B,S)
    new_xyz = index_points(xyz, fps_idx)                         # (B,S,3)
    idx = knn_indices(new_xyz, xyz, nsample)                     # (B,S,K)
    grouped_xyz = index_points(xyz, idx)                         # (B,S,K,3)
    grouped_xyz_norm = grouped_xyz - new_xyz[:, :, None, :]
    if points is not None:
        grouped_points = index_points(points, idx)               # (B,S,K,D)
        new_points = jnp.concatenate([grouped_xyz_norm, grouped_points], axis=-1)
    else:
        new_points = grouped_xyz_norm
    return new_xyz, new_points


def sample_and_group_all(xyz, points):
    B, N, C = xyz.shape
    new_xyz = jnp.zeros((B, 1, C), xyz.dtype)
    grouped_xyz = xyz[:, None, :, :]
    if points is not None:
        new_points = jnp.concatenate([grouped_xyz, points[:, None, :, :]], axis=-1)
    else:
        new_points = grouped_xyz
    return new_xyz, new_points


def init_augmentor_params(key, npoint, nsample):
    """Deterministic Augmentor nn.Parameters (same init ranges as the module)."""
    k_kept = nsample * 3 // 4
    ks = jax.random.split(key, 7)
    u = jax.random.uniform
    return {
        "theta": u(ks[0], (npoint, 1), minval=-0.1, maxval=0.1),
        "alpha": u(ks[1], (npoint, 1), minval=-0.1, maxval=0.1),
        "beta":  u(ks[2], (npoint, 1), minval=-0.1, maxval=0.1),
        "gamma": u(ks[3], (npoint, 1), minval=-0.1, maxval=0.1),
        "scale": u(ks[4], (npoint, 1), minval=0.95, maxval=1.05),
        "trans": u(ks[5], (npoint, 1), minval=-0.05, maxval=0.05),
        "jitter": u(ks[6], (npoint, k_kept, 3), minval=-0.01, maxval=0.01),
    }


def augment(new_points, p):
    """Augmentor.forward (eval): keep 3/4 of the neighbors, per-centroid scale,
    two rotations, translation and jitter on the xyz channels; features pass
    through untouched (as in the reference, whose in-place ops act on copies).
    Output is emitted in bf16 so the grouped tensor's HBM footprint is halved
    before it streams into the Pallas kernel."""
    kk = p["jitter"].shape[1]
    # TODO(synk): reference permutes the kept neighbors with torch.randperm;
    # identity order is used (the downstream max over neighbors is invariant
    # to order, though not to which subset is kept).
    pts = new_points[:, :, :kk, :]                               # (B,S,kk,3+D)
    x = pts[..., 0] * p["scale"]
    y = pts[..., 1] * p["scale"]
    z = pts[..., 2] * p["scale"]
    al = jnp.sqrt(p["alpha"] ** 2)
    be = jnp.sqrt(p["beta"] ** 2)
    ga = jnp.sqrt(p["gamma"] ** 2)
    th = jnp.sqrt(p["theta"] ** 2)
    a = jnp.cos(al) * jnp.cos(be)
    b = jnp.cos(al) * jnp.sin(be) * jnp.sin(ga) - jnp.sin(al) * jnp.cos(ga)
    c = jnp.cos(al) * jnp.sin(be) * jnp.cos(ga) + jnp.sin(al) * jnp.sin(ga)
    d = jnp.sin(al) * jnp.cos(be)
    e = jnp.sin(al) * jnp.sin(be) * jnp.sin(ga) + jnp.cos(al) * jnp.cos(ga)
    f = jnp.sin(al) * jnp.sin(be) * jnp.cos(ga) - jnp.cos(al) * jnp.sin(ga)
    g = -jnp.sin(be)
    h = jnp.cos(be) * jnp.sin(ga)
    i = jnp.cos(be) * jnp.cos(ga)
    x_r = x * a + y * b + z * c
    y_r = x * d + y * e + z * f
    z_r = x * g + y * h + z * i
    ct, st = jnp.cos(th), jnp.sin(th)
    x_rr = x_r * ct + z_r * st
    y_rr = y_r
    z_rr = -x_r * st + z_r * ct
    x_o = x_rr + p["trans"]
    y_o = y_rr + p["trans"]
    z_o = z_rr + p["trans"]
    new_xyz = jnp.stack([x_o, y_o, z_o], axis=3) + p["jitter"]   # (B,S,kk,3)
    return jnp.concatenate([new_xyz.astype(jnp.bfloat16),
                            pts[..., 3:].astype(jnp.bfloat16)], axis=3)


# ---------------------------------------------------------------------------
# Pallas kernel: stacked (1x1 conv + folded BN + ReLU) as flat 2-D matmuls,
# then max over the neighbor (sublane) axis.
# ---------------------------------------------------------------------------
def _round_up(x, m):
    return ((x + m - 1) // m) * m


def _vmem_capacity_bytes():
    """Physical VMEM of the attached chip; conservative 64 MiB (v7x) fallback."""
    try:
        info = pltpu.get_tpu_info()
        for name in ("vmem_capacity_bytes", "vmem_bytes", "vmem_size_bytes"):
            v = getattr(info, name, None)
            if v:
                return int(v)
    except Exception:
        pass
    try:
        kind = jax.devices()[0].device_kind.lower()
        if ("v5" in kind) or ("v6" in kind):
            return 128 * 1024 * 1024
    except Exception:
        pass
    return 64 * 1024 * 1024


def _vmem_bill(tile_s, K, Cin, weights, biases, cp_last):
    """Full per-step VMEM bill: double-buffered input/output blocks, weights and
    biases (double-buffered by the pipeline), the live f32 accumulator and
    post-ReLU tensor of the widest layer, its bf16 recast, and the reshaped
    copy feeding the neighbor max."""
    rows = tile_s * K
    c_max = max(int(w.shape[1]) for w in weights)
    bill = 2 * rows * Cin * 2                        # input block, bf16, x2 buffers
    bill += 2 * tile_s * cp_last * 4                 # output block, f32, x2 buffers
    for w, b in zip(weights, biases):
        bill += 2 * (int(w.size) * 2 + int(b.size) * 4)
    bill += rows * c_max * 4 * 2                     # f32 acc + f32 post-ReLU
    bill += rows * c_max * 2                         # bf16 next-layer input
    bill += tile_s * cp_last * 4                     # reshaped copy for the max
    return bill


def _pick_tile_s(S, B, K, Cin, weights, biases, cp_last, vmem_limit):
    """Largest S tile (divisor of S, multiple of 8 or S itself) whose full VMEM
    bill fits in ~60% of the VMEM limit; when B == 1 keep >= 2 grid cells so
    v7x's two TensorCores both get work."""
    budget = int(vmem_limit * 0.6)
    cands = sorted({t for t in (S, 1024, 512, 256, 128, 64, 32, 16, 8)
                    if t <= S and S % t == 0}, reverse=True)
    fitting = [t for t in cands
               if _vmem_bill(t, K, Cin, weights, biases, cp_last) <= budget]
    if not fitting:
        fitting = [cands[-1]]
    if B == 1:
        split = [t for t in fitting if S // t >= 2]
        if split:
            return split[0]
    return fitting[0]


def _make_mlp_max_kernel(num_layers, tile_s, k_neighbors):
    def kernel(x_ref, *refs):
        out_ref = refs[-1]
        wb = refs[:-1]
        x = x_ref[0]                                  # (tile_s*K, Cin) bf16
        y = None
        for l in range(num_layers):
            w = wb[2 * l][...]                        # (Cin_l, Cp_l) bf16
            b = wb[2 * l + 1][...]                    # (1, Cp_l)   f32
            acc = jnp.dot(x, w, preferred_element_type=jnp.float32)   # MXU, f32 acc
            y = jnp.maximum(acc + b, 0.0)             # f32 VPU, lane-dense (Cp=128k)
            if l < num_layers - 1:
                x = y.astype(jnp.bfloat16)            # bf16 MXU input for next layer
        # max over neighbors: K is a multiple of 8 -> clean sublane reduction
        y3 = y.reshape(tile_s, k_neighbors, y.shape[-1])
        out_ref[0] = jnp.max(y3, axis=1)              # (tile_s, Cp_last) f32 store

    return kernel


def mlp_max_pallas(grouped, weights, biases, cout_last):
    """grouped (B,S,K,Cin) float; weights[l] (Cin_l, Cp_l) bf16 (lane-padded);
    biases[l] (1, Cp_l) f32.  Returns (B, S, cout_last) f32."""
    B, S, K, Cin = grouped.shape
    L = len(weights)
    cp_last = weights[-1].shape[1]

    # Align the neighbor axis to 8 sublanes by duplicating the nearest neighbor
    # (kNN indices are distance-sorted); the max over neighbors is invariant to
    # duplicates, so this is exact.
    K_pad = _round_up(K, 8)
    grouped = grouped.astype(jnp.bfloat16)            # no-op on the augmented path
    if K_pad != K:
        dup = jnp.broadcast_to(grouped[:, :, :1, :], (B, S, K_pad - K, Cin))
        grouped = jnp.concatenate([grouped, dup], axis=2)

    vmem_cap = _vmem_capacity_bytes()
    vmem_limit = (vmem_cap * 3) // 4                  # 96 MiB v5e/v6e, 48 MiB v7x
    tile_s = _pick_tile_s(S, B, K_pad, Cin, weights, biases, cp_last, vmem_limit)
    n_s_tiles = S // tile_s

    # Flatten (S,K) once; Cin stays compact in HBM (no pad blow-up of the
    # grouped tensor) and the tensor is already bf16 (half the streaming bytes).
    x2d = grouped.reshape(B, S * K_pad, Cin)

    in_specs = [pl.BlockSpec((1, tile_s * K_pad, Cin), lambda b, s: (b, s, 0))]
    flat_args = [x2d]
    for w, bvec in zip(weights, biases):
        # TODO(synk): pipeline_mode=pl.Buffered(1) on these constant-index
        # blocks would return their second VMEM buffer to tile_s on v7x; the
        # VMEM bill above already accounts for the double buffer instead.
        in_specs.append(pl.BlockSpec(w.shape, lambda b, s: (0, 0)))
        in_specs.append(pl.BlockSpec(bvec.shape, lambda b, s: (0, 0)))
        flat_args.extend([w, bvec])

    out_spec = pl.BlockSpec((1, tile_s, cp_last), lambda b, s: (b, s, 0))

    flops = 2 * B * S * K_pad * sum(int(w.shape[0]) * int(w.shape[1])
                                    for w in weights)
    bytes_accessed = (int(x2d.size) * 2
                      + sum(int(w.size) * 2 for w in weights)
                      + sum(int(bv.size) * 4 for bv in biases)
                      + B * S * cp_last * 4)

    out_pad = pl.pallas_call(
        _make_mlp_max_kernel(L, tile_s, K_pad),
        out_shape=jax.ShapeDtypeStruct((B, S, cp_last), jnp.float32),
        grid=(B, n_s_tiles),
        in_specs=in_specs,
        out_specs=out_spec,
        compiler_params=pltpu.CompilerParams(
            dimension_semantics=("parallel", "parallel"),
            vmem_limit_bytes=int(vmem_limit)),
        cost_estimate=pl.CostEstimate(
            flops=int(flops), transcendentals=0,
            bytes_accessed=int(bytes_accessed)),
    )(*flat_args)

    if cp_last == cout_last:      # production SA layers (128/256/1024): no slice
        return out_pad
    return out_pad[:, :, :cout_last]


# ---------------------------------------------------------------------------
# Parameters: conv weight/bias with eval-mode BatchNorm folded in, lane-padded.
# ---------------------------------------------------------------------------
def build_mlp_params(key, in_channel, mlp):
    eps = 1e-5
    ws, bs = [], []
    last = in_channel          # logical in-channels of this layer
    last_pad = in_channel      # actual (padded) rows of this layer's weight
    for out_ch in mlp:
        key, kw, kb = jax.random.split(key, 3)
        w = jax.random.normal(kw, (out_ch, last), jnp.float32) * 0.1
        b = jax.random.normal(kb, (out_ch,), jnp.float32) * 0.1
        # BatchNorm2d eval stats at construction: gamma=1, beta=0, mean=0, var=1
        gamma = jnp.ones((out_ch,), jnp.float32)
        beta = jnp.zeros((out_ch,), jnp.float32)
        mean = jnp.zeros((out_ch,), jnp.float32)
        var = jnp.ones((out_ch,), jnp.float32)
        scale = gamma / jnp.sqrt(var + eps)
        w_eff = (w * scale[:, None]).T                 # (last, out_ch)
        b_eff = (b - mean) * scale + beta              # (out_ch,)
        out_pad = _round_up(out_ch, 128)               # lane-dense Cout
        w_pad = jnp.zeros((last_pad, out_pad), jnp.float32)
        w_pad = w_pad.at[:last, :out_ch].set(w_eff)    # zero pad rows/cols: exact
        b_pad = jnp.zeros((1, out_pad), jnp.float32).at[0, :out_ch].set(b_eff)
        ws.append(w_pad.astype(jnp.bfloat16))          # bf16 MXU input
        bs.append(b_pad)                               # f32 bias (VPU)
        last = out_ch
        last_pad = out_pad
    return ws, bs


# ---------------------------------------------------------------------------
# Forward pass (PointNetSetAbstraction, eval mode)
# ---------------------------------------------------------------------------
def pointnet_sa_forward(xyz, points, params, *, npoint, radius, nsample,
                        mlp, group_all):
    """xyz (B,3,N), points (B,D,N) -> new_xyz (B,3,S), new_points (B,mlp[-1],S)."""
    del radius  # the reference sample_and_group uses kNN grouping; radius unused
    xyz_t = jnp.transpose(xyz, (0, 2, 1))                        # (B,N,3)
    pts_t = jnp.transpose(points, (0, 2, 1)) if points is not None else None
    if group_all:
        new_xyz, grouped = sample_and_group_all(xyz_t, pts_t)
    else:
        new_xyz, grouped = sample_and_group(npoint, nsample, xyz_t, pts_t)
        grouped = augment(grouped, params["aug"])                # (B,S,K',3+D) bf16
    ws, bs = params["mlp"]
    feat = mlp_max_pallas(grouped, ws, bs, cout_last=mlp[-1])    # (B,S,Cout)
    return (jnp.transpose(new_xyz, (0, 2, 1)),                   # (B,3,S)
            jnp.transpose(feat, (0, 2, 1)))                      # (B,Cout,S)


# ---------------------------------------------------------------------------
if __name__ == "__main__":
    B, D, N = 2, 4, 32
    npoint, radius, nsample = 8, 0.4, 8
    mlp = (16, 32, 64)
    in_channel = D + 3        # xyz(3) + point features(D), as the module expects

    key = jax.random.PRNGKey(0)
    kxyz, kpts, kmlp, kaug = jax.random.split(key, 4)
    xyz = jax.random.uniform(kxyz, (B, 3, N), dtype=jnp.float32)
    points = jax.random.normal(kpts, (B, D, N), dtype=jnp.float32)

    params = {
        "mlp": build_mlp_params(kmlp, in_channel, mlp),
        "aug": init_augmentor_params(kaug, npoint, nsample),
    }

    fwd = jax.jit(functools.partial(
        pointnet_sa_forward, npoint=npoint, radius=radius, nsample=nsample,
        mlp=mlp, group_all=False))

    new_xyz, new_points = fwd(xyz, points, params)
    jax.block_until_ready((new_xyz, new_points))

    assert new_xyz.shape == (B, 3, npoint)
    assert new_points.shape == (B, mlp[-1], npoint)
    print("KERNEL_OK")
</pallas_src>

<mosaic_0001>
module attributes {stable_mosaic.version = 11 : i64} {
  func.func @kernel(%arg0: i32, %arg1: i32, %arg2: memref<1x64x7xbf16, #tpu.memory_space<vmem>>, %arg3: memref<7x128xbf16, #tpu.memory_space<vmem>>, %arg4: memref<1x128xf32, #tpu.memory_space<vmem>>, %arg5: memref<128x128xbf16, #tpu.memory_space<vmem>>, %arg6: memref<1x128xf32, #tpu.memory_space<vmem>>, %arg7: memref<128x128xbf16, #tpu.memory_space<vmem>>, %arg8: memref<1x128xf32, #tpu.memory_space<vmem>>, %arg9: memref<1x8x128xf32, #tpu.memory_space<vmem>>) attributes {dimension_semantics = [#tpu.dimension_semantics<parallel>, #tpu.dimension_semantics<parallel>], iteration_bounds = array<i64: 2, 1>, scalar_prefetch = 0 : i64, scratch_operands = 0 : i64, tpu.core_type = #tpu.core_type<tc>, window_params = [{transform_indices = @transform_0, window_bounds = array<i64: 1, 64, 7>}, {pipeline_mode = #tpu.pipeline_mode<synchronous>, transform_indices = @transform_1, window_bounds = array<i64: 7, 128>}, {pipeline_mode = #tpu.pipeline_mode<synchronous>, transform_indices = @transform_2, window_bounds = array<i64: 1, 128>}, {pipeline_mode = #tpu.pipeline_mode<synchronous>, transform_indices = @transform_3, window_bounds = array<i64: 128, 128>}, {pipeline_mode = #tpu.pipeline_mode<synchronous>, transform_indices = @transform_4, window_bounds = array<i64: 1, 128>}, {pipeline_mode = #tpu.pipeline_mode<synchronous>, transform_indices = @transform_5, window_bounds = array<i64: 128, 128>}, {pipeline_mode = #tpu.pipeline_mode<synchronous>, transform_indices = @transform_6, window_bounds = array<i64: 1, 128>}, {transform_indices = @transform_7, window_bounds = array<i64: 1, 8, 128>}]} {
    %c0 = arith.constant 0 : index
    %c0_0 = arith.constant 0 : index
    %c0_1 = arith.constant 0 : index
    %0 = vector.load %arg2[%c0, %c0_0, %c0_1] : memref<1x64x7xbf16, #tpu.memory_space<vmem>>, vector<1x64x7xbf16>
    %1 = vector.shape_cast %0 : vector<1x64x7xbf16> to vector<64x7xbf16>
    %c0_2 = arith.constant 0 : index
    %c0_3 = arith.constant 0 : index
    %2 = vector.load %arg3[%c0_2, %c0_3] : memref<7x128xbf16, #tpu.memory_space<vmem>>, vector<7x128xbf16>
    %c0_4 = arith.constant 0 : index
    %c0_5 = arith.constant 0 : index
    %3 = vector.load %arg4[%c0_4, %c0_5] : memref<1x128xf32, #tpu.memory_space<vmem>>, vector<1x128xf32>
    %cst = arith.constant dense<0.000000e+00> : vector<64x128xf32>
    %4 = tpu.matmul %1, %2, %cst {dimension_numbers = #tpu.dot_dimension_numbers<[1], [0], [0], [1], [0, 0, 1, 1], [], []>} : vector<64x7xbf16>, vector<7x128xbf16>, vector<64x128xf32> -> vector<64x128xf32>
    %5 = vector.broadcast %3 : vector<1x128xf32> to vector<64x128xf32>
    %6 = arith.addf %4, %5 : vector<64x128xf32>
    %cst_6 = arith.constant 0.000000e+00 : f32
    %7 = vector.broadcast %cst_6 : f32 to vector<64x128xf32>
    %8 = arith.maximumf %6, %7 : vector<64x128xf32>
    %9 = arith.truncf %8 : vector<64x128xf32> to vector<64x128xbf16>
    %c0_7 = arith.constant 0 : index
    %c0_8 = arith.constant 0 : index
    %10 = vector.load %arg5[%c0_7, %c0_8] : memref<128x128xbf16, #tpu.memory_space<vmem>>, vector<128x128xbf16>
    %c0_9 = arith.constant 0 : index
    %c0_10 = arith.constant 0 : index
    %11 = vector.load %arg6[%c0_9, %c0_10] : memref<1x128xf32, #tpu.memory_space<vmem>>, vector<1x128xf32>
    %cst_11 = arith.constant dense<0.000000e+00> : vector<64x128xf32>
    %12 = tpu.matmul %9, %10, %cst_11 {dimension_numbers = #tpu.dot_dimension_numbers<[1], [0], [0], [1], [0, 0, 1, 1], [], []>} : vector<64x128xbf16>, vector<128x128xbf16>, vector<64x128xf32> -> vector<64x128xf32>
    %13 = vector.broadcast %11 : vector<1x128xf32> to vector<64x128xf32>
    %14 = arith.addf %12, %13 : vector<64x128xf32>
    %cst_12 = arith.constant 0.000000e+00 : f32
    %15 = vector.broadcast %cst_12 : f32 to vector<64x128xf32>
    %16 = arith.maximumf %14, %15 : vector<64x128xf32>
    %17 = arith.truncf %16 : vector<64x128xf32> to vector<64x128xbf16>
    %c0_13 = arith.constant 0 : index
    %c0_14 = arith.constant 0 : index
    %18 = vector.load %arg7[%c0_13, %c0_14] : memref<128x128xbf16, #tpu.memory_space<vmem>>, vector<128x128xbf16>
    %c0_15 = arith.constant 0 : index
    %c0_16 = arith.constant 0 : index
    %19 = vector.load %arg8[%c0_15, %c0_16] : memref<1x128xf32, #tpu.memory_space<vmem>>, vector<1x128xf32>
    %cst_17 = arith.constant dense<0.000000e+00> : vector<64x128xf32>
    %20 = tpu.matmul %17, %18, %cst_17 {dimension_numbers = #tpu.dot_dimension_numbers<[1], [0], [0], [1], [0, 0, 1, 1], [], []>} : vector<64x128xbf16>, vector<128x128xbf16>, vector<64x128xf32> -> vector<64x128xf32>
    %21 = vector.broadcast %19 : vector<1x128xf32> to vector<64x128xf32>
    %22 = arith.addf %20, %21 : vector<64x128xf32>
    %cst_18 = arith.constant 0.000000e+00 : f32
    %23 = vector.broadcast %cst_18 : f32 to vector<64x128xf32>
    %24 = arith.maximumf %22, %23 : vector<64x128xf32>
    %25 = vector.shape_cast %24 : vector<64x128xf32> to vector<8x8x128xf32>
    %cst_19 = arith.constant dense<0xFF800000> : vector<8x128xf32>
    %26 = vector.multi_reduction <maximumf>, %25, %cst_19 [1] : vector<8x8x128xf32> to vector<8x128xf32>
    %c0_20 = arith.constant 0 : index
    %c0_21 = arith.constant 0 : index
    %c0_22 = arith.constant 0 : index
    %27 = vector.load %arg9[%c0_20, %c0_21, %c0_22] : memref<1x8x128xf32, #tpu.memory_space<vmem>>, vector<1x8x128xf32>
    %28 = vector.shape_cast %27 : vector<1x8x128xf32> to vector<8x128xf32>
    %29 = vector.shape_cast %26 : vector<8x128xf32> to vector<1x8x128xf32>
    tpu.vector_store %arg9[%c0_20, %c0_21, %c0_22], %29 {strides = array<i32>} : memref<1x8x128xf32, #tpu.memory_space<vmem>>, vector<1x8x128xf32>,
    return
  }
  func.func @transform_0(%arg0: i32, %arg1: i32) -> (i32, i32, i32) {
    %c0_i32 = arith.constant 0 : i32
    %c0_i32_0 = arith.constant 0 : i32
    return %arg0, %arg1, %c0_i32 : i32, i32, i32
  }
  func.func @transform_1(%arg0: i32, %arg1: i32) -> (i32, i32) {
    %c0_i32 = arith.constant 0 : i32
    %c0_i32_0 = arith.constant 0 : i32
    %c0_i32_1 = arith.constant 0 : i32
    return %c0_i32, %c0_i32_0 : i32, i32
  }
  func.func @transform_2(%arg0: i32, %arg1: i32) -> (i32, i32) {
    %c0_i32 = arith.constant 0 : i32
    %c0_i32_0 = arith.constant 0 : i32
    %c0_i32_1 = arith.constant 0 : i32
    return %c0_i32, %c0_i32_0 : i32, i32
  }
  func.func @transform_3(%arg0: i32, %arg1: i32) -> (i32, i32) {
    %c0_i32 = arith.constant 0 : i32
    %c0_i32_0 = arith.constant 0 : i32
    %c0_i32_1 = arith.constant 0 : i32
    return %c0_i32, %c0_i32_0 : i32, i32
  }
  func.func @transform_4(%arg0: i32, %arg1: i32) -> (i32, i32) {
    %c0_i32 = arith.constant 0 : i32
    %c0_i32_0 = arith.constant 0 : i32
    %c0_i32_1 = arith.constant 0 : i32
    return %c0_i32, %c0_i32_0 : i32, i32
  }
  func.func @transform_5(%arg0: i32, %arg1: i32) -> (i32, i32) {
    %c0_i32 = arith.constant 0 : i32
    %c0_i32_0 = arith.constant 0 : i32
    %c0_i32_1 = arith.constant 0 : i32
    return %c0_i32, %c0_i32_0 : i32, i32
  }
  func.func @transform_6(%arg0: i32, %arg1: i32) -> (i32, i32) {
    %c0_i32 = arith.constant 0 : i32
    %c0_i32_0 = arith.constant 0 : i32
    %c0_i32_1 = arith.constant 0 : i32
    return %c0_i32, %c0_i32_0 : i32, i32
  }
  func.func @transform_7(%arg0: i32, %arg1: i32) -> (i32, i32, i32) {
    %c0_i32 = arith.constant 0 : i32
    %c0_i32_0 = arith.constant 0 : i32
    return %arg0, %arg1, %c0_i32 : i32, i32, i32
  }
}

</mosaic_0001>

<llo_original>
// kernel: custom-call.8
$region0: #{custom-call.8}
  %s0 = inlined_call_operand.vmem [shape: f32[2,32], index: 0, kind: output, shape index: {}]

// kernel: pointnet_sa_forward.1
$region0: #{pointnet_sa_forward.1}
  #allocation0 [shape = 'u32[]', space=smem, size = 0x4, offset = 0x4, fixed_abs, tag = 'smem constant byte address 0x4 - core index']
  #allocation1 [shape = 'u32[72,128]{1,0:T(1,128)}', space=vmem, size = 0x9000, scoped, tag = 'internal scratch']
  %s0 = inlined_call_operand.vmem [shape: bf16[2,64,7], index: 0, kind: input, shape index: {}]
  %s1 = inlined_call_operand.vmem [shape: bf16[7,128], index: 1, kind: input, shape index: {}]
  %s2 = inlined_call_operand.vmem [shape: f32[1,128], index: 2, kind: input, shape index: {}]
  %s3 = inlined_call_operand.vmem [shape: bf16[128,128], index: 3, kind: input, shape index: {}]
  %s4 = inlined_call_operand.vmem [shape: f32[1,128], index: 4, kind: input, shape index: {}]
  %s5 = inlined_call_operand.vmem [shape: bf16[128,128], index: 5, kind: input, shape index: {}]
  %s6 = inlined_call_operand.vmem [shape: f32[1,128], index: 6, kind: input, shape index: {}]
  %s7 = inlined_call_operand.vmem [shape: f32[2,8,128], index: 7, kind: output, shape index: {}]
  %s8 = sld [smem:[#allocation0]]
  $region61: #{pointnet_sa_forward.1} parent=0
    _
  %s10 = ssub.s32 1, %s8
  %s11 = scalar_select 0, %s10, %s8
  loop: start=0, step=1, limit=4
  $region2: #{pointnet_sa_forward.1} parent=0 // loop_pre_header
    _
  $region3: #{pointnet_sa_forward.1} parent=0 // loop_header
    %s13 = sphi 0, %s17
    %p14 = scmp.ge.s32.totalorder %s13, 4
    %s20 = sphi 0, %s32
    %s21 = sphi 0, %s28
    %s22 = sphi 0, %s20
    %s23 = sphi 0, %s21
    %s24 = sphi 0, %s22
    %s25 = sphi 0, %s23
    %s37 = sphi 0, %s39
    %s40 = sphi 0, %s37
    %s41 = sphi 0, %s40
    %s57 = sphi 0, %s41
    %s61 = sphi 0, %s61
    %s63 = sphi 0, %s61
    %s64 = sphi 0, %s63
    %s78 = sphi 0, %s64
    %s82 = sphi 0, %s82
    %s84 = sphi 0, %s82
    %s85 = sphi 0, %s84
    %s99 = sphi 0, %s85
    %s103 = sphi 0, %s103
    %s105 = sphi 0, %s103
    %s106 = sphi 0, %s105
    %s120 = sphi 0, %s106
    %s124 = sphi 0, %s124
    %s126 = sphi 0, %s124
    %s127 = sphi 0, %s126
    %s141 = sphi 0, %s127
    %s145 = sphi 0, %s145
    %s147 = sphi 0, %s145
    %s148 = sphi 0, %s147
    %s162 = sphi 0, %s148
    %s166 = sphi 0, %s166
    %s168 = sphi 0, %s166
    %s169 = sphi 0, %s168
    %s183 = sphi 0, %s169
    %s191 = sphi 0, %s193
    %s194 = sphi 0, %s191
    %s195 = sphi 0, %s194
    %s211 = sphi 0, %s195
  $region4: #{pointnet_sa_forward.1} parent=0 // loop_header_branch
    %16 = sbr.rel (%p14) target = $region8
  $region5: #{pointnet_sa_forward.1} parent=0 // loop_body
    %s18 = ssub.s32 %s13, 1
    %s19 = ssub.s32 %s13, 2
    %s26 = sadd.s32 1, %s21
    %p27 = scmp.ge.s32.totalorder %s26, 1
    %s28 = scalar_select %p27, 0, %s26
    %s29 = sadd.s32 1, %s20
    %s30 = scalar_select %p27, %s29, %s20
    %p31 = scmp.ge.s32.totalorder %s30, 2
    %s32 = scalar_select %p31, 0, %s30
    %s33 = ssub.s32 %s20, %s32
    %s34 = ssub.s32 %s21, %s28
    %s35 = sor.u32 %s33, %s34
    %p36 = scmp.eq.s32.totalorder %s35, 0
    %s38 = sadd.s32 %s37, 1
    %s39 = scalar_select %p36, %s37, %s38
    %p42 = pneg %p36
    %p43 = scmp.eq.s32.totalorder %s13, 1
    %p44 = por %p42, %p43
    %p45 = scmp.ne.s32.totalorder %s37, %s40
    %p46 = scmp.eq.s32.totalorder %s13, 0
    %p47 = por %p45, %p46
    %p48 = scmp.ne.s32.totalorder %s37, %s40
    %p49 = scmp.eq.s32.totalorder %s18, 1
    %p50 = por %p48, %p49
    %p51 = scmp.ne.s32.totalorder %s40, %s41
    %p52 = scmp.eq.s32.totalorder %s18, 0
    %p53 = por %p51, %p52
    %p54 = scmp.ne.s32.totalorder %s40, %s41
    %p55 = scmp.eq.s32.totalorder %s19, 1
    %p56 = por %p54, %p55
    %p58 = scmp.ne.s32.totalorder %s41, %s57
    %p59 = scmp.eq.s32.totalorder %s19, 0
    %p60 = por %p58, %p59
    %s62 = sadd.s32 %s61, 1
    %p65 = scmp.eq.s32.totalorder %s13, 1
    %p66 = scmp.ne.s32.totalorder %s61, %s63
    %p67 = scmp.eq.s32.totalorder %s13, 0
    %p68 = por %p66, %p67
    %p69 = scmp.ne.s32.totalorder %s61, %s63
    %p70 = scmp.eq.s32.totalorder %s18, 1
    %p71 = por %p69, %p70
    %p72 = scmp.ne.s32.totalorder %s63, %s64
    %p73 = scmp.eq.s32.totalorder %s18, 0
    %p74 = por %p72, %p73
    %p75 = scmp.ne.s32.totalorder %s63, %s64
    %p76 = scmp.eq.s32.totalorder %s19, 1
    %p77 = por %p75, %p76
    %p79 = scmp.ne.s32.totalorder %s64, %s78
    %p80 = scmp.eq.s32.totalorder %s19, 0
    %p81 = por %p79, %p80
    %s83 = sadd.s32 %s82, 1
    %p86 = scmp.eq.s32.totalorder %s13, 1
    %p87 = scmp.ne.s32.totalorder %s82, %s84
    %p88 = scmp.eq.s32.totalorder %s13, 0
    %p89 = por %p87, %p88
    %p90 = scmp.ne.s32.totalorder %s82, %s84
    %p91 = scmp.eq.s32.totalorder %s18, 1
    %p92 = por %p90, %p91
    %p93 = scmp.ne.s32.totalorder %s84, %s85
    %p94 = scmp.eq.s32.totalorder %s18, 0
    %p95 = por %p93, %p94
    %p96 = scmp.ne.s32.totalorder %s84, %s85
    %p97 = scmp.eq.s32.totalorder %s19, 1
    %p98 = por %p96, %p97
    %p100 = scmp.ne.s32.totalorder %s85, %s99
    %p101 = scmp.eq.s32.totalorder %s19, 0
    %p102 = por %p100, %p101
    %s104 = sadd.s32 %s103, 1
    %p107 = scmp.eq.s32.totalorder %s13, 1
    %p108 = scmp.ne.s32.totalorder %s103, %s105
    %p109 = scmp.eq.s32.totalorder %s13, 0
    %p110 = por %p108, %p109
    %p111 = scmp.ne.s32.totalorder %s103, %s105
    %p112 = scmp.eq.s32.totalorder %s18, 1
    %p113 = por %p111, %p112
    %p114 = scmp.ne.s32.totalorder %s105, %s106
    %p115 = scmp.eq.s32.totalorder %s18, 0
    %p116 = por %p114, %p115
    %p117 = scmp.ne.s32.totalorder %s105, %s106
    %p118 = scmp.eq.s32.totalorder %s19, 1
    %p119 = por %p117, %p118
    %p121 = scmp.ne.s32.totalorder %s106, %s120
    %p122 = scmp.eq.s32.totalorder %s19, 0
    %p123 = por %p121, %p122
    %s125 = sadd.s32 %s124, 1
    %p128 = scmp.eq.s32.totalorder %s13, 1
    %p129 = scmp.ne.s32.totalorder %s124, %s126
    %p130 = scmp.eq.s32.totalorder %s13, 0
    %p131 = por %p129, %p130
    %p132 = scmp.ne.s32.totalorder %s124, %s126
    %p133 = scmp.eq.s32.totalorder %s18, 1
    %p134 = por %p132, %p133
    %p135 = scmp.ne.s32.totalorder %s126, %s127
    %p136 = scmp.eq.s32.totalorder %s18, 0
    %p137 = por %p135, %p136
    %p138 = scmp.ne.s32.totalorder %s126, %s127
    %p139 = scmp.eq.s32.totalorder %s19, 1
    %p140 = por %p138, %p139
    %p142 = scmp.ne.s32.totalorder %s127, %s141
    %p143 = scmp.eq.s32.totalorder %s19, 0
    %p144 = por %p142, %p143
    %s146 = sadd.s32 %s145, 1
    %p149 = scmp.eq.s32.totalorder %s13, 1
    %p150 = scmp.ne.s32.totalorder %s145, %s147
    %p151 = scmp.eq.s32.totalorder %s13, 0
    %p152 = por %p150, %p151
    %p153 = scmp.ne.s32.totalorder %s145, %s147
    %p154 = scmp.eq.s32.totalorder %s18, 1
    %p155 = por %p153, %p154
    %p156 = scmp.ne.s32.totalorder %s147, %s148
    %p157 = scmp.eq.s32.totalorder %s18, 0
    %p158 = por %p156, %p157
    %p159 = scmp.ne.s32.totalorder %s147, %s148
    %p160 = scmp.eq.s32.totalorder %s19, 1
    %p161 = por %p159, %p160
    %p163 = scmp.ne.s32.totalorder %s148, %s162
    %p164 = scmp.eq.s32.totalorder %s19, 0
    %p165 = por %p163, %p164
    %s167 = sadd.s32 %s166, 1
    %p170 = scmp.eq.s32.totalorder %s13, 1
    %p171 = scmp.ne.s32.totalorder %s166, %s168
    %p172 = scmp.eq.s32.totalorder %s13, 0
    %p173 = por %p171, %p172
    %p174 = scmp.ne.s32.totalorder %s166, %s168
    %p175 = scmp.eq.s32.totalorder %s18, 1
    %p176 = por %p174, %p175
    %p177 = scmp.ne.s32.totalorder %s168, %s169
    %p178 = scmp.eq.s32.totalorder %s18, 0
    %p179 = por %p177, %p178
    %p180 = scmp.ne.s32.totalorder %s168, %s169
    %p181 = scmp.eq.s32.totalorder %s19, 1
    %p182 = por %p180, %p181
    %p184 = scmp.ne.s32.totalorder %s169, %s183
    %p185 = scmp.eq.s32.totalorder %s19, 0
    %p186 = por %p184, %p185
    %s187 = ssub.s32 %s20, %s32
    %s188 = ssub.s32 %s21, %s28
    %s189 = sor.u32 %s187, %s188
    %p190 = scmp.eq.s32.totalorder %s189, 0
    %s192 = sadd.s32 %s191, 1
    %s193 = scalar_select %p190, %s191, %s192
    %p196 = pneg %p190
    %p197 = scmp.eq.s32.totalorder %s13, 1
    %p198 = por %p196, %p197
    %p199 = scmp.ne.s32.totalorder %s191, %s194
    %p200 = scmp.eq.s32.totalorder %s13, 0
    %p201 = por %p199, %p200
    %p202 = scmp.ne.s32.totalorder %s191, %s194
    %p203 = scmp.eq.s32.totalorder %s18, 1
    %p204 = por %p202, %p203
    %p205 = scmp.ne.s32.totalorder %s194, %s195
    %p206 = scmp.eq.s32.totalorder %s18, 0
    %p207 = por %p205, %p206
    %p208 = scmp.ne.s32.totalorder %s194, %s195
    %p209 = scmp.eq.s32.totalorder %s19, 1
    %p210 = por %p208, %p209
    %p212 = scmp.ne.s32.totalorder %s195, %s211
    %p213 = scmp.eq.s32.totalorder %s19, 0
    %p214 = por %p212, %p213
    %p215 = scmp.le.s32.totalorder 1, %s13
    %p216 = scmp.lt.s32.totalorder %s13, 3
    %p217 = pnand %p215, %p216
    %p218 = pneg %p217
    // Predicated region
    $region9: #{pointnet_sa_forward.1} parent=5 // pred_check
      _
    $region10: #{pointnet_sa_forward.1} parent=5 // pred_check_branch
      %220 = sbr.rel (%p217) target = $region12
    $region11: #{pointnet_sa_forward.1} parent=5 // pred_region
      %s221 = ssub.s32 %s13, 1
      // Predicated region
      $region13: #{pointnet_sa_forward.1} parent=11 // pred_check
        %p222 = pneg %p74
      $region14: #{pointnet_sa_forward.1} parent=11 // pred_check_branch
        %224 = sbr.rel (%p222) target = $region16
      $region15: #{pointnet_sa_forward.1} parent=11 // pred_region
        _
      $region16: #{pointnet_sa_forward.1} parent=11 // pred_fallthru
        _
      // Predicated region
      $region17: #{pointnet_sa_forward.1} parent=11 // pred_check
        %p225 = pneg %p95
      $region18: #{pointnet_sa_forward.1} parent=11 // pred_check_branch
        %227 = sbr.rel (%p225) target = $region20
      $region19: #{pointnet_sa_forward.1} parent=11 // pred_region
        _
      $region20: #{pointnet_sa_forward.1} parent=11 // pred_fallthru
        _
      // Predicated region
      $region21: #{pointnet_sa_forward.1} parent=11 // pred_check
        %p228 = pneg %p116
      $region22: #{pointnet_sa_forward.1} parent=11 // pred_check_branch
        %230 = sbr.rel (%p228) target = $region24
      $region23: #{pointnet_sa_forward.1} parent=11 // pred_region
        _
      $region24: #{pointnet_sa_forward.1} parent=11 // pred_fallthru
        _
      // Predicated region
      $region25: #{pointnet_sa_forward.1} parent=11 // pred_check
        %p231 = pneg %p137
      $region26: #{pointnet_sa_forward.1} parent=11 // pred_check_branch
        %233 = sbr.rel (%p231) target = $region28
      $region27: #{pointnet_sa_forward.1} parent=11 // pred_region
        _
      $region28: #{pointnet_sa_forward.1} parent=11 // pred_fallthru
        _
      // Predicated region
      $region29: #{pointnet_sa_forward.1} parent=11 // pred_check
        %p234 = pneg %p158
      $region30: #{pointnet_sa_forward.1} parent=11 // pred_check_branch
        %236 = sbr.rel (%p234) target = $region32
      $region31: #{pointnet_sa_forward.1} parent=11 // pred_region
        _
      $region32: #{pointnet_sa_forward.1} parent=11 // pred_fallthru
        _
      // Predicated region
      $region33: #{pointnet_sa_forward.1} parent=11 // pred_check
        %p237 = pneg %p179
      $region34: #{pointnet_sa_forward.1} parent=11 // pred_check_branch
        %239 = sbr.rel (%p237) target = $region36
      $region35: #{pointnet_sa_forward.1} parent=11 // pred_region
        _
      $region36: #{pointnet_sa_forward.1} parent=11 // pred_fallthru
        _
    $region12: #{pointnet_sa_forward.1} parent=5 // pred_fallthru
      _
    %p240 = scmp.lt.s32.totalorder %s13, 2
    // Predicated region
    $region37: #{pointnet_sa_forward.1} parent=5 // pred_check
      %p241 = pneg %p240
    $region38: #{pointnet_sa_forward.1} parent=5 // pred_check_branch
      %243 = sbr.rel (%p241) target = $region40
    $region39: #{pointnet_sa_forward.1} parent=5 // pred_region
      // Predicated region
      $region41: #{pointnet_sa_forward.1} parent=39 // pred_check
        %p244 = pneg %p47
      $region42: #{pointnet_sa_forward.1} parent=39 // pred_check_branch
        %246 = sbr.rel (%p244) target = $region44
      $region43: #{pointnet_sa_forward.1} parent=39 // pred_region
        %s247 = smul.u32 8, %s21
        %p248 = scmp.lt.s32.totalorder %s20, 1
        %s249 = scalar_select %p248, %s20, 1
        %p250 = scmp.lt.s32.totalorder %s247, 7
        %s251 = scalar_select %p250, %s247, 7
        %s252 = smul.addr %s249, 8
        %s253 = sadd.s32 %s251, %s252
        %s254 = smul.addr %s253, 4
        %s255 = scalar_lea.vmem %s0, %s254
        %s256 = smul.u32 8, %s21
      $region44: #{pointnet_sa_forward.1} parent=39 // pred_fallthru
        _
    $region40: #{pointnet_sa_forward.1} parent=5 // pred_fallthru
      _
    %p257 = scmp.le.s32.totalorder 1, %s13
    %p258 = scmp.lt.s32.totalorder %s13, 3
    %p259 = pnand %p257, %p258
    %p260 = pneg %p259
    // Predicated region
    $region45: #{pointnet_sa_forward.1} parent=5 // pred_check
      _
    $region46: #{pointnet_sa_forward.1} parent=5 // pred_check_branch
      %262 = sbr.rel (%p259) target = $region48
    $region47: #{pointnet_sa_forward.1} parent=5 // pred_region
      %s263 = ssub.s32 %s13, 1
      %s264 = smul.u32 8, %s23
      %p265 = scmp.lt.s32.totalorder %s22, 1
      %s266 = scalar_select %p265, %s22, 1
      %p267 = scmp.lt.s32.totalorder %s264, 7
      %s268 = scalar_select %p267, %s264, 7
      %s269 = smul.addr %s266, 8
      %s270 = sadd.s32 %s268, %s269
      %s271 = smul.addr %s270, 4
      %s272 = scalar_lea.vmem %s0, %s271
      %p273 = pneg %p53
      %p274 = pneg %p50
      %p275 = pneg %p74
      %p276 = pneg %p71
      %p277 = pneg %p95
      %p278 = pneg %p92
      %p279 = pneg %p116
      %p280 = pneg %p113
      %p281 = pneg %p137
      %p282 = pneg %p134
      %p283 = pneg %p158
      %p284 = pneg %p155
      %p285 = pneg %p179
      %p286 = pneg %p176
      %p287 = pneg %p207
      %p288 = pneg %p204
      %p289 = scmp.lt.s32.totalorder %s22, 1
      %s290 = scalar_select %p289, %s22, 1
      %p291 = scmp.lt.s32.totalorder %s23, 0
      %s292 = scalar_select %p291, %s23, 0
      %s293 = sadd.s32 %s292, %s290
      %s294 = smul.addr %s293, 8
      %s295 = scalar_lea.vmem %s7, %s294
      %s296 = smul.u32 8, %s23
      %p297 = scmp.lt.s32.totalorder %s22, 1
      %s298 = scalar_select %p297, %s22, 1
      %p299 = scmp.lt.s32.totalorder %s296, 7
      %s300 = scalar_select %p299, %s296, 7
      %s301 = smul.addr %s298, 8
      %s302 = sadd.s32 %s300, %s301
      %s303 = smul.addr %s302, 4
      %s304 = scalar_lea.vmem %s0, %s303
      %s305 = smul.u32 8, %s23
      %p306 = scmp.lt.s32.totalorder %s22, 1
      %s307 = scalar_select %p306, %s22, 1
      %p308 = scmp.lt.s32.totalorder %s23, 0
      %s309 = scalar_select %p308, %s23, 0
      %s310 = sadd.s32 %s309, %s307
      %s311 = smul.addr %s310, 8
      %s312 = scalar_lea.vmem %s7, %s311
      %v314 = vld [vmem:[%s304] sm:$0xf]
      %v315 = vld [vmem:[%s304 + $0x4] sm:$0xf]
      %v316 = vld [vmem:[%s304 + $0x8] sm:$0xf]
      %v317 = vld [vmem:[%s304 + $0xc] sm:$0xf]
      %v318 = vld [vmem:[%s304 + $0x10] sm:$0xf]
      %v319 = vld [vmem:[%s304 + $0x14] sm:$0xf]
      %v320 = vld [vmem:[%s304 + $0x18] sm:$0xf]
      %v321 = vld [vmem:[%s304 + $0x1c] sm:$0xf]
      %v322 = vld [vmem:[%s1] sm:$0xf]
      %v323 = vld [vmem:[%s2] sm:$0x1]
      %v325 = vperm.slane %v323, 0
      %v335 = vunpack.c.l.b16 %v314
      %v336 = vunpack.c.l.b16 %v315
      %v337 = vunpack.c.l.b16 %v316
      %v338 = vunpack.c.l.b16 %v317
      %v339 = vunpack.c.l.b16 %v318
      %v340 = vunpack.c.l.b16 %v319
      %v341 = vunpack.c.l.b16 %v320
      %v342 = vunpack.c.l.b16 %v321
      %v343 = vpack.c.b16 %v336, %v335
      %v344 = vpack.c.b16 %v338, %v337
      %v345 = vpack.c.b16 %v340, %v339
      %v346 = vpack.c.b16 %v342, %v341
      %vm347 = vcmask 56320
      %v349 = vsel %vm347, %v343, 0
      %v352 = vsel %vm347, %v344, 0
      %v355 = vsel %vm347, %v345, 0
      %v358 = vsel %vm347, %v346, 0
      %vm360 = vcmask 1042432
      %vm361 = vcmask 1043456
      %v362 = vsel %vm360, 4294967295, 65535
      %v363 = vsel %vm361, %v362, 0
      %v365 = vand.u32 %v322, %v363
      %367 = vmatpush.bf16.msra.mxu0 0
      %368 = vmatpush.bf16.msra.mxu0 0
      %369 = vmatpush.bf16.msra.mxu0 0
      %370 = vmatpush.bf16.msra.mxu0 0
      %371 = vmatpush.bf16.msra.mxu0 0
      %372 = vmatpush.bf16.msra.mxu0 0
      %373 = vmatpush.bf16.msra.mxu0 0
      %374 = vmatpush.bf16.msra.mxu0 %v365
      %375 = vmatmul.bf16.gmra.mxu0 %v349
      %v376 = vpop.f32.mrf.mxu0
      %v377 = vadd.f32 %v325, %v376
      %v378 = vpop.f32.mrf.mxu0
      %v379 = vadd.f32 %v325, %v378
      %380 = vmatmul.bf16.gmra.mxu0 %v352
      %v381 = vpop.f32.mrf.mxu0
      %v382 = vadd.f32 %v325, %v381
      %v383 = vpop.f32.mrf.mxu0
      %v384 = vadd.f32 %v325, %v383
      %385 = vmatmul.bf16.gmra.mxu0 %v355
      %v386 = vpop.f32.mrf.mxu0
      %v387 = vadd.f32 %v325, %v386
      %v388 = vpop.f32.mrf.mxu0
      %v389 = vadd.f32 %v325, %v388
      %390 = vmatmul.bf16.gmra.mxu0 %v358
      %v391 = vpop.f32.mrf.mxu0
      %v392 = vadd.f32 %v325, %v391
      %v393 = vpop.f32.mrf.mxu0
      %v394 = vadd.f32 %v325, %v393
      %395 = vdwg.mxu0
      %v396 = vmax.f32 %v377, 0.0
      %v397 = vmax.f32 %v379, 0.0
      %v398 = vmax.f32 %v382, 0.0
      %v399 = vmax.f32 %v384, 0.0
      %v400 = vmax.f32 %v387, 0.0
      %v401 = vmax.f32 %v389, 0.0
      %v402 = vmax.f32 %v392, 0.0
      %v403 = vmax.f32 %v394, 0.0
      %v404 = vpack.c.bf16 %v397, %v396
      %v405 = vpack.c.bf16 %v399, %v398
      %v406 = vpack.c.bf16 %v401, %v400
      %v407 = vpack.c.bf16 %v403, %v402
      %v408 = vld [vmem:[%s3] sm:$0xf]
      %v409 = vld [vmem:[%s3 + $0x4] sm:$0xf]
      %v410 = vld [vmem:[%s3 + $0x8] sm:$0xf]
      %v411 = vld [vmem:[%s3 + $0xc] sm:$0xf]
      %v412 = vld [vmem:[%s3 + $0x10] sm:$0xf]
      %v413 = vld [vmem:[%s3 + $0x14] sm:$0xf]
      %v414 = vld [vmem:[%s3 + $0x18] sm:$0xf]
      %v415 = vld [vmem:[%s3 + $0x1c] sm:$0xf]
      %v416 = vld [vmem:[%s3 + $0x20] sm:$0xf]
      %v417 = vld [vmem:[%s3 + $0x24] sm:$0xf]
      %v418 = vld [vmem:[%s3 + $0x28] sm:$0xf]
      %v419 = vld [vmem:[%s3 + $0x2c] sm:$0xf]
      %v420 = vld [vmem:[%s3 + $0x30] sm:$0xf]
      %v421 = vld [vmem:[%s3 + $0x34] sm:$0xf]
      %v422 = vld [vmem:[%s3 + $0x38] sm:$0xf]
      %v423 = vld [vmem:[%s3 + $0x3c] sm:$0xf]
      %v424 = vld [vmem:[%s4] sm:$0x1]
      %v426 = vperm.slane %v424, 0
      %v444 = vunpack.c.l.b16 %v408
      %v445 = vunpack.c.l.b16 %v409
      %v446 = vunpack.c.l.b16 %v410
      %v447 = vunpack.c.l.b16 %v411
      %v448 = vunpack.c.l.b16 %v412
      %v449 = vunpack.c.l.b16 %v413
      %v450 = vunpack.c.l.b16 %v414
      %v451 = vunpack.c.l.b16 %v415
      %v452 = vunpack.c.l.b16 %v416
      %v453 = vunpack.c.l.b16 %v417
      %v454 = vunpack.c.l.b16 %v418
      %v455 = vunpack.c.l.b16 %v419
      %v456 = vunpack.c.l.b16 %v420
      %v457 = vunpack.c.l.b16 %v421
      %v458 = vunpack.c.l.b16 %v422
      %v459 = vunpack.c.l.b16 %v423
      %v460 = vpack.c.b16 %v445, %v444
      %v461 = vpack.c.b16 %v447, %v446
      %v462 = vpack.c.b16 %v449, %v448
      %v463 = vpack.c.b16 %v451, %v450
      %v464 = vpack.c.b16 %v453, %v452
      %v465 = vpack.c.b16 %v455, %v454
      %v466 = vpack.c.b16 %v457, %v456
      %v467 = vpack.c.b16 %v459, %v458
      %476 = vmatpush.bf16.msra.mxu0 %v467
      %477 = vmatpush.bf16.msra.mxu0 %v466
      %478 = vmatpush.bf16.msra.mxu0 %v465
      %479 = vmatpush.bf16.msra.mxu0 %v464
      %480 = vmatpush.bf16.msra.mxu0 %v463
      %481 = vmatpush.bf16.msra.mxu0 %v462
      %482 = vmatpush.bf16.msra.mxu0 %v461
      %483 = vmatpush.bf16.msra.mxu0 %v460
      %484 = vmatmul.bf16.gmra.mxu0 %v404
      %v485 = vpop.f32.mrf.mxu0
      %v486 = vadd.f32 %v426, %v485
      %v487 = vpop.f32.mrf.mxu0
      %v488 = vadd.f32 %v426, %v487
      %489 = vmatmul.bf16.gmra.mxu0 %v405
      %v490 = vpop.f32.mrf.mxu0
      %v491 = vadd.f32 %v426, %v490
      %v492 = vpop.f32.mrf.mxu0
      %v493 = vadd.f32 %v426, %v492
      %494 = vmatmul.bf16.gmra.mxu0 %v406
      %v495 = vpop.f32.mrf.mxu0
      %v496 = vadd.f32 %v426, %v495
      %v497 = vpop.f32.mrf.mxu0
      %v498 = vadd.f32 %v426, %v497
      %499 = vmatmul.bf16.gmra.mxu0 %v407
      %v500 = vpop.f32.mrf.mxu0
      %v501 = vadd.f32 %v426, %v500
      %v502 = vpop.f32.mrf.mxu0
      %v503 = vadd.f32 %v426, %v502
      %504 = vdwg.mxu0
      %v505 = vmax.f32 %v486, 0.0
      %v506 = vmax.f32 %v488, 0.0
      %v507 = vmax.f32 %v491, 0.0
      %v508 = vmax.f32 %v493, 0.0
      %v509 = vmax.f32 %v496, 0.0
      %v510 = vmax.f32 %v498, 0.0
      %v511 = vmax.f32 %v501, 0.0
      %v512 = vmax.f32 %v503, 0.0
      %v513 = vpack.c.bf16 %v506, %v505
      %v514 = vpack.c.bf16 %v508, %v507
      %v515 = vpack.c.bf16 %v510, %v509
      %v516 = vpack.c.bf16 %v512, %v511
      %v517 = vld [vmem:[%s5] sm:$0xf]
      %v518 = vld [vmem:[%s5 + $0x4] sm:$0xf]
      %v519 = vld [vmem:[%s5 + $0x8] sm:$0xf]
      %v520 = vld [vmem:[%s5 + $0xc] sm:$0xf]
      %v521 = vld [vmem:[%s5 + $0x10] sm:$0xf]
      %v522 = vld [vmem:[%s5 + $0x14] sm:$0xf]
      %v523 = vld [vmem:[%s5 + $0x18] sm:$0xf]
      %v524 = vld [vmem:[%s5 + $0x1c] sm:$0xf]
      %v525 = vld [vmem:[%s5 + $0x20] sm:$0xf]
      %v526 = vld [vmem:[%s5 + $0x24] sm:$0xf]
      %v527 = vld [vmem:[%s5 + $0x28] sm:$0xf]
      %v528 = vld [vmem:[%s5 + $0x2c] sm:$0xf]
      %v529 = vld [vmem:[%s5 + $0x30] sm:$0xf]
      %v530 = vld [vmem:[%s5 + $0x34] sm:$0xf]
      %v531 = vld [vmem:[%s5 + $0x38] sm:$0xf]
      %v532 = vld [vmem:[%s5 + $0x3c] sm:$0xf]
      %v533 = vld [vmem:[%s6] sm:$0x1]
      %v535 = vperm.slane %v533, 0
      %v553 = vunpack.c.l.b16 %v517
      %v554 = vunpack.c.l.b16 %v518
      %v555 = vunpack.c.l.b16 %v519
      %v556 = vunpack.c.l.b16 %v520
      %v557 = vunpack.c.l.b16 %v521
      %v558 = vunpack.c.l.b16 %v522
      %v559 = vunpack.c.l.b16 %v523
      %v560 = vunpack.c.l.b16 %v524
      %v561 = vunpack.c.l.b16 %v525
      %v562 = vunpack.c.l.b16 %v526
      %v563 = vunpack.c.l.b16 %v527
      %v564 = vunpack.c.l.b16 %v528
      %v565 = vunpack.c.l.b16 %v529
      %v566 = vunpack.c.l.b16 %v530
      %v567 = vunpack.c.l.b16 %v531
      %v568 = vunpack.c.l.b16 %v532
      %v569 = vpack.c.b16 %v554, %v553
      %v570 = vpack.c.b16 %v556, %v555
      %v571 = vpack.c.b16 %v558, %v557
      %v572 = vpack.c.b16 %v560, %v559
      %v573 = vpack.c.b16 %v562, %v561
      %v574 = vpack.c.b16 %v564, %v563
      %v575 = vpack.c.b16 %v566, %v565
      %v576 = vpack.c.b16 %v568, %v567
      %585 = vmatpush.bf16.msra.mxu0 %v576
      %586 = vmatpush.bf16.msra.mxu0 %v575
      %587 = vmatpush.bf16.msra.mxu0 %v574
      %588 = vmatpush.bf16.msra.mxu0 %v573
      %589 = vmatpush.bf16.msra.mxu0 %v572
      %590 = vmatpush.bf16.msra.mxu0 %v571
      %591 = vmatpush.bf16.msra.mxu0 %v570
      %592 = vmatpush.bf16.msra.mxu0 %v569
      %593 = vmatmul.bf16.gmra.mxu0 %v513
      %v594 = vpop.f32.mrf.mxu0
      %v595 = vadd.f32 %v535, %v594
      %v596 = vpop.f32.mrf.mxu0
      %v597 = vadd.f32 %v535, %v596
      %598 = vmatmul.bf16.gmra.mxu0 %v514
      %v599 = vpop.f32.mrf.mxu0
      %v600 = vadd.f32 %v535, %v599
      %v601 = vpop.f32.mrf.mxu0
      %v602 = vadd.f32 %v535, %v601
      %603 = vmatmul.bf16.gmra.mxu0 %v515
      %v604 = vpop.f32.mrf.mxu0
      %v605 = vadd.f32 %v535, %v604
      %v606 = vpop.f32.mrf.mxu0
      %v607 = vadd.f32 %v535, %v606
      %608 = vmatmul.bf16.gmra.mxu0 %v516
      %v609 = vpop.f32.mrf.mxu0
      %v610 = vadd.f32 %v535, %v609
      %v611 = vpop.f32.mrf.mxu0
      %v612 = vadd.f32 %v535, %v611
      %613 = vdwg.mxu0
      %v614 = vmax.f32 %v595, 0.0
      %v615 = vmax.f32 %v597, 0.0
      %v616 = vmax.f32 %v600, 0.0
      %v617 = vmax.f32 %v602, 0.0
      %v618 = vmax.f32 %v605, 0.0
      %v619 = vmax.f32 %v607, 0.0
      %v620 = vmax.f32 %v610, 0.0
      %v621 = vmax.f32 %v612, 0.0
      %v622 = vrot.slane %v614, 4
      %v623 = vmax.f32 %v614, %v622
      %v624 = vrot.slane %v623, 2
      %v625 = vmax.f32 %v623, %v624
      %v626 = vrot.slane %v625, 1
      %v627 = vmax.f32 %v625, %v626
      %v628 = vrot.slane %v615, 4
      %v629 = vmax.f32 %v615, %v628
      %v630 = vrot.slane %v629, 2
      %v631 = vmax.f32 %v629, %v630
      %v632 = vrot.slane %v631, 1
      %v633 = vmax.f32 %v631, %v632
      %v634 = vrot.slane %v616, 4
      %v635 = vmax.f32 %v616, %v634
      %v636 = vrot.slane %v635, 2
      %v637 = vmax.f32 %v635, %v636
      %v638 = vrot.slane %v637, 1
      %v639 = vmax.f32 %v637, %v638
      %v640 = vrot.slane %v617, 4
      %v641 = vmax.f32 %v617, %v640
      %v642 = vrot.slane %v641, 2
      %v643 = vmax.f32 %v641, %v642
      %v644 = vrot.slane %v643, 1
      %v645 = vmax.f32 %v643, %v644
      %v646 = vrot.slane %v618, 4
      %v647 = vmax.f32 %v618, %v646
      %v648 = vrot.slane %v647, 2
      %v649 = vmax.f32 %v647, %v648
      %v650 = vrot.slane %v649, 1
      %v651 = vmax.f32 %v649, %v650
      %v652 = vrot.slane %v619, 4
      %v653 = vmax.f32 %v619, %v652
      %v654 = vrot.slane %v653, 2
      %v655 = vmax.f32 %v653, %v654
      %v656 = vrot.slane %v655, 1
      %v657 = vmax.f32 %v655, %v656
      %v658 = vrot.slane %v620, 4
      %v659 = vmax.f32 %v620, %v658
      %v660 = vrot.slane %v659, 2
      %v661 = vmax.f32 %v659, %v660
      %v662 = vrot.slane %v661, 1
      %v663 = vmax.f32 %v661, %v662
      %v664 = vrot.slane %v621, 4
      %v665 = vmax.f32 %v621, %v664
      %v666 = vrot.slane %v665, 2
      %v667 = vmax.f32 %v665, %v666
      %v668 = vrot.slane %v667, 1
      %v669 = vmax.f32 %v667, %v668
      %vm678 = vcmask 1041409
      %v679 = vsel %vm678, %v633, %v627
      %vm680 = vcmask 1042434
      %v681 = vsel %vm680, %v639, %v679
      %vm682 = vcmask 1043459
      %v683 = vsel %vm682, %v645, %v681
      %vm684 = vcmask 1044484
      %v685 = vsel %vm684, %v651, %v683
      %vm686 = vcmask 1045509
      %v687 = vsel %vm686, %v657, %v685
      %vm688 = vcmask 1046534
      %v689 = vsel %vm688, %v663, %v687
      %vm690 = vcmask 1047559
      %v691 = vsel %vm690, %v669, %v689
      %693 = vst [vmem:[%s312] sm:$0xff] %v691
      %p694 = scmp.lt.s32.totalorder %s22, 1
      %s695 = scalar_select %p694, %s22, 1
      %p696 = scmp.lt.s32.totalorder %s23, 0
      %s697 = scalar_select %p696, %s23, 0
      %s698 = sadd.s32 %s697, %s695
      %s699 = smul.addr %s698, 8
      %s700 = scalar_lea.vmem %s7, %s699
      // Predicated region
      $region49: #{pointnet_sa_forward.1} parent=47 // pred_check
        %p701 = pneg %p204
      $region50: #{pointnet_sa_forward.1} parent=47 // pred_check_branch
        %703 = sbr.rel (%p701) target = $region52
      $region51: #{pointnet_sa_forward.1} parent=47 // pred_region
        _
      $region52: #{pointnet_sa_forward.1} parent=47 // pred_fallthru
        _
    $region48: #{pointnet_sa_forward.1} parent=5 // pred_fallthru
      _
    %p704 = scmp.le.s32.totalorder 2, %s13
    // Predicated region
    $region53: #{pointnet_sa_forward.1} parent=5 // pred_check
      %p705 = pneg %p704
    $region54: #{pointnet_sa_forward.1} parent=5 // pred_check_branch
      %707 = sbr.rel (%p705) target = $region56
    $region55: #{pointnet_sa_forward.1} parent=5 // pred_region
      %s708 = ssub.s32 %s13, 2
      // Predicated region
      $region57: #{pointnet_sa_forward.1} parent=55 // pred_check
        %p709 = pneg %p210
      $region58: #{pointnet_sa_forward.1} parent=55 // pred_check_branch
        %711 = sbr.rel (%p709) target = $region60
      $region59: #{pointnet_sa_forward.1} parent=55 // pred_region
        %p712 = scmp.lt.s32.totalorder %s24, 1
        %s713 = scalar_select %p712, %s24, 1
        %p714 = scmp.lt.s32.totalorder %s25, 0
        %s715 = scalar_select %p714, %s25, 0
        %s716 = sadd.s32 %s715, %s713
        %s717 = smul.addr %s716, 8
        %s718 = scalar_lea.vmem %s7, %s717
      $region60: #{pointnet_sa_forward.1} parent=55 // pred_fallthru
        _
    $region56: #{pointnet_sa_forward.1} parent=5 // pred_fallthru
      _
  $region6: #{pointnet_sa_forward.1} parent=0 // loop_footer
    %s17 = sadd.s32 1, %s13
  $region7: #{pointnet_sa_forward.1} parent=0 // loop_footer_branch
    %12 = sbr.rel target = $region3
  $region8: #{pointnet_sa_forward.1} parent=0 // loop_exit
    _

</llo_original>
